<compile_context>
chip_gen: v7x
topology: tpu7x:2x2x1
jax: 0.10.0
libtpu: 0.0.40
codegen_flags: <defaults>
</compile_context>

<pallas_src>
import functools

import jax
import jax.numpy as jnp
from jax.experimental import pallas as pl
from jax.experimental.pallas import tpu as pltpu

# "NT" dimension numbers: contract the LAST dim of both operands (A @ B^T).
_NT = (((1,), (1,)), ((), ()))


def _attn_kernel(x_ref, w_ref, b_ref, out_ref, *, batch):
    f32, bf16 = jnp.float32, jnp.bfloat16

    wq = w_ref[0]   # (D, D) bf16, softmax scale pre-folded
    wk = w_ref[1]   # (D, D) bf16
    wv = w_ref[2]   # (D, D) bf16
    bq = b_ref[0]   # (D, D) f32, pre-broadcast column bias (scale folded)
    bk = b_ref[1]   # (D, D) f32, pre-broadcast row bias
    bv = b_ref[2]   # (D, D) f32, pre-broadcast column bias

    # batch is a tiny static int -> Python loop fully unrolled.
    for b in range(batch):
        xq = x_ref[0, b]   # (S, D) bf16
        xk = x_ref[1, b]   # (S, D) bf16
        xv = x_ref[2, b]   # (S, D) bf16

        # All projections in NT form, f32 accumulate, full-tile VPU bias adds:
        #   qT = (scale*Wq) @ Xq^T + scale*bq   -> (D, S)  (Q already transposed)
        #   k  = Xk @ Wk^T + bk                 -> (S, D)
        #   vT = Wv @ Xv^T + bv                 -> (D, S)  (V already transposed)
        qT = jax.lax.dot_general(wq, xq, _NT, preferred_element_type=f32) + bq
        k = jax.lax.dot_general(xk, wk, _NT, preferred_element_type=f32) + bk
        vT = jax.lax.dot_general(wv, xv, _NT, preferred_element_type=f32) + bv

        # qk = Q^T @ K^T (scale pre-folded into Wq/bq); NT form, no transposes.
        qk = jax.lax.dot_general(qT.astype(bf16), k.astype(bf16), _NT,
                                 preferred_element_type=f32)          # (D, S)

        # Softmax over the last (lane) axis, in f32.
        m = jnp.max(qk, axis=-1, keepdims=True)
        e = jnp.exp(qk - m)
        p = e * pl.reciprocal(jnp.sum(e, axis=-1, keepdims=True), approx=True)

        # Dropout == identity (eval mode).
        # TODO(synk): torch training-mode dropout (p=1.0) would zero the tensor.

        # output = (p @ V)^T = V^T @ p^T  -> NT with lhs = V^T, rhs = p.
        ob = jax.lax.dot_general(vT.astype(bf16), p.astype(bf16), _NT,
                                 preferred_element_type=f32)          # (D, D)
        out_ref[b] = ob.astype(out_ref.dtype)


def prepare_params(params, scale_factor=1.0):
    """One-time (hoisted) preprocessing of the Linear params.

    Folds the softmax scale into the Q projection, casts matmul operands to
    bf16, pre-broadcasts biases to full (D, D) tiles, and stacks everything so
    the kernel needs only 2 weight/bias DMAs per call.
    """
    wq, bq, wk, bk, wv, bv = params
    D = wq.shape[0]
    s = jnp.asarray(scale_factor, jnp.float32)

    w_stack = jnp.stack([wq * s, wk, wv]).astype(jnp.bfloat16)          # (3, D, D)
    b_stack = jnp.stack([
        jnp.broadcast_to((bq * s)[:, None], (D, D)),   # column bias for Q^T
        jnp.broadcast_to(bk[None, :], (D, D)),         # row bias for K
        jnp.broadcast_to(bv[:, None], (D, D)),         # column bias for V^T
    ]).astype(jnp.float32)                                              # (3, D, D)
    return w_stack, b_stack


@jax.jit
def sdp_model(query, key, value, w_stack, b_stack):
    """query/key/value: (B, S, D) float32 with S == D. Returns (B, D, D) float32."""
    B, S, D = query.shape
    assert S == D, "torch semantics of this module (matmul(q^T, k^T)) require S == D"

    # Single stacked activation input -> one DMA (fused with the kernel dispatch
    # under jit).  bf16 operands; all accumulation stays f32 in the kernel.
    x = jnp.stack([query, key, value]).astype(jnp.bfloat16)            # (3, B, S, D)

    kernel = functools.partial(_attn_kernel, batch=B)

    return pl.pallas_call(
        kernel,
        out_shape=jax.ShapeDtypeStruct((B, D, D), jnp.float32),
        grid_spec=pltpu.PrefetchScalarGridSpec(
            num_scalar_prefetch=0,
            # Single grid step: this problem size is entirely fixed-overhead
            # bound, so no batch tiling and no megacore split.  For large
            # B*S*D one would batch-tile this axis and mark it "parallel".
            grid=(1,),
            in_specs=[
                pl.BlockSpec((3, B, S, D), lambda i: (0, 0, 0, 0)),
                pl.BlockSpec((3, D, D), lambda i: (0, 0, 0)),
                pl.BlockSpec((3, D, D), lambda i: (0, 0, 0)),
            ],
            out_specs=pl.BlockSpec((B, D, D), lambda i: (0, 0, 0)),
        ),
        compiler_params=pltpu.CompilerParams(
            dimension_semantics=("arbitrary",)),
    )(x, w_stack, b_stack)


def _reference_f32(query, key, value, params, scale_factor=1.0):
    """Pure-f32 reference matching the torch module (eval-mode dropout)."""
    wq, bq, wk, bk, wv, bv = params
    q = query @ wq.T + bq
    k = key @ wk.T + bk
    v = value @ wv.T + bv
    qk = jnp.matmul(jnp.swapaxes(q, -2, -1), jnp.swapaxes(k, -2, -1)) * scale_factor
    p = jax.nn.softmax(qk, axis=-1)
    return jnp.swapaxes(jnp.matmul(p, v), -2, -1)


def _reference_precision_matched(query, key, value, params, scale_factor=1.0):
    """Mirrors the kernel's bf16-operand / f32-accumulate matmuls for a tight check."""
    f32, bf16 = jnp.float32, jnp.bfloat16
    wq, bq, wk, bk, wv, bv = params
    s = jnp.asarray(scale_factor, f32)
    q16 = query.astype(bf16)
    k16 = key.astype(bf16)
    v16 = value.astype(bf16)
    wq_s = (wq * s).astype(bf16)
    wk_c = wk.astype(bf16)
    wv_c = wv.astype(bf16)
    q = jnp.einsum('bsd,od->bso', q16, wq_s, preferred_element_type=f32) + (bq * s)
    k = jnp.einsum('bsd,od->bso', k16, wk_c, preferred_element_type=f32) + bk
    v = jnp.einsum('bsd,od->bso', v16, wv_c, preferred_element_type=f32) + bv
    q = q.astype(bf16)
    k = k.astype(bf16)
    v = v.astype(bf16)
    qk = jnp.einsum('bci,bjc->bij', q, k, preferred_element_type=f32)
    p = jax.nn.softmax(qk, axis=-1)
    return jnp.einsum('bij,bja->bai', p.astype(bf16), v, preferred_element_type=f32)


if __name__ == "__main__":
    B, S, D = 2, 32, 32   # S must equal D (constraint of the original module)
    scale_factor = 0.5

    key0 = jax.random.PRNGKey(0)
    k1, k2, k3, k4, k5, k6, k7, k8, k9 = jax.random.split(key0, 9)

    bound = 1.0 / (D ** 0.5)
    wq = jax.random.uniform(k1, (D, D), jnp.float32, -bound, bound)
    bq = jax.random.uniform(k2, (D,), jnp.float32, -bound, bound)
    wk = jax.random.uniform(k3, (D, D), jnp.float32, -bound, bound)
    bk = jax.random.uniform(k4, (D,), jnp.float32, -bound, bound)
    wv = jax.random.uniform(k5, (D, D), jnp.float32, -bound, bound)
    bv = jax.random.uniform(k6, (D,), jnp.float32, -bound, bound)
    params = (wq, bq, wk, bk, wv, bv)

    query = jax.random.normal(k7, (B, S, D), jnp.float32)
    key_in = jax.random.normal(k8, (B, S, D), jnp.float32)
    value = jax.random.normal(k9, (B, S, D), jnp.float32)

    # Hoisted, one-time param preprocessing (scale fold / casts / stacking).
    w_stack, b_stack = prepare_params(params, scale_factor=scale_factor)
    w_stack, b_stack = jax.block_until_ready((w_stack, b_stack))

    out = sdp_model(query, key_in, value, w_stack, b_stack)
    out = jax.block_until_ready(out)
    assert out.shape == (B, D, D)

    # Tight check against a reference that uses the same matmul precision
    # (residual difference comes from pl.reciprocal(approx=True)).
    ref_m = _reference_precision_matched(query, key_in, value, params, scale_factor)
    assert jnp.allclose(out, ref_m, atol=1e-2, rtol=1e-2), "mismatch vs matched reference"

    # Loose sanity check against the pure-f32 torch-semantics reference
    # (differences are bf16 rounding of the matmul operands).
    ref32 = _reference_f32(query, key_in, value, params, scale_factor)
    assert jnp.allclose(out, ref32, atol=1.5e-1, rtol=1.5e-1), "mismatch vs f32 reference"

    print("KERNEL_OK")
</pallas_src>

<mosaic_0001>
module attributes {stable_mosaic.version = 11 : i64} {
  func.func @_attn_kernel(%arg0: i32, %arg1: memref<3x2x32x32xbf16, #tpu.memory_space<vmem>>, %arg2: memref<3x32x32xbf16, #tpu.memory_space<vmem>>, %arg3: memref<3x32x32xf32, #tpu.memory_space<vmem>>, %arg4: memref<2x32x32xf32, #tpu.memory_space<vmem>>) attributes {dimension_semantics = [#tpu.dimension_semantics<arbitrary>], iteration_bounds = array<i64: 1>, scalar_prefetch = 0 : i64, scratch_operands = 0 : i64, tpu.core_type = #tpu.core_type<tc>, window_params = [{pipeline_mode = #tpu.pipeline_mode<synchronous>, transform_indices = @transform_0, window_bounds = array<i64: 3, 2, 32, 32>}, {pipeline_mode = #tpu.pipeline_mode<synchronous>, transform_indices = @transform_1, window_bounds = array<i64: 3, 32, 32>}, {pipeline_mode = #tpu.pipeline_mode<synchronous>, transform_indices = @transform_2, window_bounds = array<i64: 3, 32, 32>}, {pipeline_mode = #tpu.pipeline_mode<synchronous>, transform_indices = @transform_3, window_bounds = array<i64: 2, 32, 32>}]} {
    %c0 = arith.constant 0 : index
    %c0_0 = arith.constant 0 : index
    %c0_1 = arith.constant 0 : index
    %0 = vector.load %arg2[%c0, %c0_0, %c0_1] : memref<3x32x32xbf16, #tpu.memory_space<vmem>>, vector<1x32x32xbf16>
    %1 = vector.shape_cast %0 : vector<1x32x32xbf16> to vector<32x32xbf16>
    %c1 = arith.constant 1 : index
    %c0_2 = arith.constant 0 : index
    %c0_3 = arith.constant 0 : index
    %2 = vector.load %arg2[%c1, %c0_2, %c0_3] : memref<3x32x32xbf16, #tpu.memory_space<vmem>>, vector<1x32x32xbf16>
    %3 = vector.shape_cast %2 : vector<1x32x32xbf16> to vector<32x32xbf16>
    %c2 = arith.constant 2 : index
    %c0_4 = arith.constant 0 : index
    %c0_5 = arith.constant 0 : index
    %4 = vector.load %arg2[%c2, %c0_4, %c0_5] : memref<3x32x32xbf16, #tpu.memory_space<vmem>>, vector<1x32x32xbf16>
    %5 = vector.shape_cast %4 : vector<1x32x32xbf16> to vector<32x32xbf16>
    %c0_6 = arith.constant 0 : index
    %c0_7 = arith.constant 0 : index
    %c0_8 = arith.constant 0 : index
    %6 = vector.load %arg3[%c0_6, %c0_7, %c0_8] : memref<3x32x32xf32, #tpu.memory_space<vmem>>, vector<1x32x32xf32>
    %7 = vector.shape_cast %6 : vector<1x32x32xf32> to vector<32x32xf32>
    %c1_9 = arith.constant 1 : index
    %c0_10 = arith.constant 0 : index
    %c0_11 = arith.constant 0 : index
    %8 = vector.load %arg3[%c1_9, %c0_10, %c0_11] : memref<3x32x32xf32, #tpu.memory_space<vmem>>, vector<1x32x32xf32>
    %9 = vector.shape_cast %8 : vector<1x32x32xf32> to vector<32x32xf32>
    %c2_12 = arith.constant 2 : index
    %c0_13 = arith.constant 0 : index
    %c0_14 = arith.constant 0 : index
    %10 = vector.load %arg3[%c2_12, %c0_13, %c0_14] : memref<3x32x32xf32, #tpu.memory_space<vmem>>, vector<1x32x32xf32>
    %11 = vector.shape_cast %10 : vector<1x32x32xf32> to vector<32x32xf32>
    %c0_15 = arith.constant 0 : index
    %c0_16 = arith.constant 0 : index
    %c0_17 = arith.constant 0 : index
    %c0_18 = arith.constant 0 : index
    %12 = vector.load %arg1[%c0_15, %c0_16, %c0_17, %c0_18] : memref<3x2x32x32xbf16, #tpu.memory_space<vmem>>, vector<1x1x32x32xbf16>
    %13 = vector.shape_cast %12 : vector<1x1x32x32xbf16> to vector<32x32xbf16>
    %c1_19 = arith.constant 1 : index
    %c0_20 = arith.constant 0 : index
    %c0_21 = arith.constant 0 : index
    %c0_22 = arith.constant 0 : index
    %14 = vector.load %arg1[%c1_19, %c0_20, %c0_21, %c0_22] : memref<3x2x32x32xbf16, #tpu.memory_space<vmem>>, vector<1x1x32x32xbf16>
    %15 = vector.shape_cast %14 : vector<1x1x32x32xbf16> to vector<32x32xbf16>
    %c2_23 = arith.constant 2 : index
    %c0_24 = arith.constant 0 : index
    %c0_25 = arith.constant 0 : index
    %c0_26 = arith.constant 0 : index
    %16 = vector.load %arg1[%c2_23, %c0_24, %c0_25, %c0_26] : memref<3x2x32x32xbf16, #tpu.memory_space<vmem>>, vector<1x1x32x32xbf16>
    %17 = vector.shape_cast %16 : vector<1x1x32x32xbf16> to vector<32x32xbf16>
    %cst = arith.constant dense<0.000000e+00> : vector<32x32xf32>
    %18 = tpu.matmul %1, %13, %cst {dimension_numbers = #tpu.dot_dimension_numbers<[1], [1], [0], [0], [0, 0, 1, 0], [], []>} : vector<32x32xbf16>, vector<32x32xbf16>, vector<32x32xf32> -> vector<32x32xf32>
    %19 = arith.addf %18, %7 : vector<32x32xf32>
    %cst_27 = arith.constant dense<0.000000e+00> : vector<32x32xf32>
    %20 = tpu.matmul %15, %3, %cst_27 {dimension_numbers = #tpu.dot_dimension_numbers<[1], [1], [0], [0], [0, 0, 1, 0], [], []>} : vector<32x32xbf16>, vector<32x32xbf16>, vector<32x32xf32> -> vector<32x32xf32>
    %21 = arith.addf %20, %9 : vector<32x32xf32>
    %cst_28 = arith.constant dense<0.000000e+00> : vector<32x32xf32>
    %22 = tpu.matmul %5, %17, %cst_28 {dimension_numbers = #tpu.dot_dimension_numbers<[1], [1], [0], [0], [0, 0, 1, 0], [], []>} : vector<32x32xbf16>, vector<32x32xbf16>, vector<32x32xf32> -> vector<32x32xf32>
    %23 = arith.addf %22, %11 : vector<32x32xf32>
    %24 = arith.truncf %19 : vector<32x32xf32> to vector<32x32xbf16>
    %25 = arith.truncf %21 : vector<32x32xf32> to vector<32x32xbf16>
    %cst_29 = arith.constant dense<0.000000e+00> : vector<32x32xf32>
    %26 = tpu.matmul %24, %25, %cst_29 {dimension_numbers = #tpu.dot_dimension_numbers<[1], [1], [0], [0], [0, 0, 1, 0], [], []>} : vector<32x32xbf16>, vector<32x32xbf16>, vector<32x32xf32> -> vector<32x32xf32>
    %cst_30 = arith.constant dense<0xFF800000> : vector<32xf32>
    %27 = vector.multi_reduction <maximumf>, %26, %cst_30 [1] : vector<32x32xf32> to vector<32xf32>
    %28 = vector.shape_cast %27 : vector<32xf32> to vector<32x1xf32>
    %29 = vector.broadcast %28 : vector<32x1xf32> to vector<32x32xf32>
    %30 = arith.subf %26, %29 : vector<32x32xf32>
    %31 = math.exp %30 : vector<32x32xf32>
    %cst_31 = arith.constant dense<0.000000e+00> : vector<32xf32>
    %32 = vector.multi_reduction <add>, %31, %cst_31 [1] : vector<32x32xf32> to vector<32xf32>
    %33 = vector.shape_cast %32 : vector<32xf32> to vector<32x1xf32>
    %34 = tpu.reciprocal %33 {approx = true} : vector<32x1xf32> -> vector<32x1xf32>
    %35 = vector.broadcast %34 : vector<32x1xf32> to vector<32x32xf32>
    %36 = arith.mulf %31, %35 : vector<32x32xf32>
    %37 = arith.truncf %23 : vector<32x32xf32> to vector<32x32xbf16>
    %38 = arith.truncf %36 : vector<32x32xf32> to vector<32x32xbf16>
    %cst_32 = arith.constant dense<0.000000e+00> : vector<32x32xf32>
    %39 = tpu.matmul %37, %38, %cst_32 {dimension_numbers = #tpu.dot_dimension_numbers<[1], [1], [0], [0], [0, 0, 1, 0], [], []>} : vector<32x32xbf16>, vector<32x32xbf16>, vector<32x32xf32> -> vector<32x32xf32>
    %c0_33 = arith.constant 0 : index
    %c0_34 = arith.constant 0 : index
    %c0_35 = arith.constant 0 : index
    %40 = vector.load %arg4[%c0_33, %c0_34, %c0_35] : memref<2x32x32xf32, #tpu.memory_space<vmem>>, vector<1x32x32xf32>
    %41 = vector.shape_cast %40 : vector<1x32x32xf32> to vector<32x32xf32>
    %42 = vector.shape_cast %39 : vector<32x32xf32> to vector<1x32x32xf32>
    tpu.vector_store %arg4[%c0_33, %c0_34, %c0_35], %42 {strides = array<i32>} : memref<2x32x32xf32, #tpu.memory_space<vmem>>, vector<1x32x32xf32>,
    %c0_36 = arith.constant 0 : index
    %c1_37 = arith.constant 1 : index
    %c0_38 = arith.constant 0 : index
    %c0_39 = arith.constant 0 : index
    %43 = vector.load %arg1[%c0_36, %c1_37, %c0_38, %c0_39] : memref<3x2x32x32xbf16, #tpu.memory_space<vmem>>, vector<1x1x32x32xbf16>
    %44 = vector.shape_cast %43 : vector<1x1x32x32xbf16> to vector<32x32xbf16>
    %c1_40 = arith.constant 1 : index
    %c1_41 = arith.constant 1 : index
    %c0_42 = arith.constant 0 : index
    %c0_43 = arith.constant 0 : index
    %45 = vector.load %arg1[%c1_40, %c1_41, %c0_42, %c0_43] : memref<3x2x32x32xbf16, #tpu.memory_space<vmem>>, vector<1x1x32x32xbf16>
    %46 = vector.shape_cast %45 : vector<1x1x32x32xbf16> to vector<32x32xbf16>
    %c2_44 = arith.constant 2 : index
    %c1_45 = arith.constant 1 : index
    %c0_46 = arith.constant 0 : index
    %c0_47 = arith.constant 0 : index
    %47 = vector.load %arg1[%c2_44, %c1_45, %c0_46, %c0_47] : memref<3x2x32x32xbf16, #tpu.memory_space<vmem>>, vector<1x1x32x32xbf16>
    %48 = vector.shape_cast %47 : vector<1x1x32x32xbf16> to vector<32x32xbf16>
    %cst_48 = arith.constant dense<0.000000e+00> : vector<32x32xf32>
    %49 = tpu.matmul %1, %44, %cst_48 {dimension_numbers = #tpu.dot_dimension_numbers<[1], [1], [0], [0], [0, 0, 1, 0], [], []>} : vector<32x32xbf16>, vector<32x32xbf16>, vector<32x32xf32> -> vector<32x32xf32>
    %50 = arith.addf %49, %7 : vector<32x32xf32>
    %cst_49 = arith.constant dense<0.000000e+00> : vector<32x32xf32>
    %51 = tpu.matmul %46, %3, %cst_49 {dimension_numbers = #tpu.dot_dimension_numbers<[1], [1], [0], [0], [0, 0, 1, 0], [], []>} : vector<32x32xbf16>, vector<32x32xbf16>, vector<32x32xf32> -> vector<32x32xf32>
    %52 = arith.addf %51, %9 : vector<32x32xf32>
    %cst_50 = arith.constant dense<0.000000e+00> : vector<32x32xf32>
    %53 = tpu.matmul %5, %48, %cst_50 {dimension_numbers = #tpu.dot_dimension_numbers<[1], [1], [0], [0], [0, 0, 1, 0], [], []>} : vector<32x32xbf16>, vector<32x32xbf16>, vector<32x32xf32> -> vector<32x32xf32>
    %54 = arith.addf %53, %11 : vector<32x32xf32>
    %55 = arith.truncf %50 : vector<32x32xf32> to vector<32x32xbf16>
    %56 = arith.truncf %52 : vector<32x32xf32> to vector<32x32xbf16>
    %cst_51 = arith.constant dense<0.000000e+00> : vector<32x32xf32>
    %57 = tpu.matmul %55, %56, %cst_51 {dimension_numbers = #tpu.dot_dimension_numbers<[1], [1], [0], [0], [0, 0, 1, 0], [], []>} : vector<32x32xbf16>, vector<32x32xbf16>, vector<32x32xf32> -> vector<32x32xf32>
    %cst_52 = arith.constant dense<0xFF800000> : vector<32xf32>
    %58 = vector.multi_reduction <maximumf>, %57, %cst_52 [1] : vector<32x32xf32> to vector<32xf32>
    %59 = vector.shape_cast %58 : vector<32xf32> to vector<32x1xf32>
    %60 = vector.broadcast %59 : vector<32x1xf32> to vector<32x32xf32>
    %61 = arith.subf %57, %60 : vector<32x32xf32>
    %62 = math.exp %61 : vector<32x32xf32>
    %cst_53 = arith.constant dense<0.000000e+00> : vector<32xf32>
    %63 = vector.multi_reduction <add>, %62, %cst_53 [1] : vector<32x32xf32> to vector<32xf32>
    %64 = vector.shape_cast %63 : vector<32xf32> to vector<32x1xf32>
    %65 = tpu.reciprocal %64 {approx = true} : vector<32x1xf32> -> vector<32x1xf32>
    %66 = vector.broadcast %65 : vector<32x1xf32> to vector<32x32xf32>
    %67 = arith.mulf %62, %66 : vector<32x32xf32>
    %68 = arith.truncf %54 : vector<32x32xf32> to vector<32x32xbf16>
    %69 = arith.truncf %67 : vector<32x32xf32> to vector<32x32xbf16>
    %cst_54 = arith.constant dense<0.000000e+00> : vector<32x32xf32>
    %70 = tpu.matmul %68, %69, %cst_54 {dimension_numbers = #tpu.dot_dimension_numbers<[1], [1], [0], [0], [0, 0, 1, 0], [], []>} : vector<32x32xbf16>, vector<32x32xbf16>, vector<32x32xf32> -> vector<32x32xf32>
    %c1_55 = arith.constant 1 : index
    %c0_56 = arith.constant 0 : index
    %c0_57 = arith.constant 0 : index
    %71 = vector.load %arg4[%c1_55, %c0_56, %c0_57] : memref<2x32x32xf32, #tpu.memory_space<vmem>>, vector<1x32x32xf32>
    %72 = vector.shape_cast %71 : vector<1x32x32xf32> to vector<32x32xf32>
    %73 = vector.shape_cast %70 : vector<32x32xf32> to vector<1x32x32xf32>
    tpu.vector_store %arg4[%c1_55, %c0_56, %c0_57], %73 {strides = array<i32>} : memref<2x32x32xf32, #tpu.memory_space<vmem>>, vector<1x32x32xf32>,
    return
  }
  func.func @transform_0(%arg0: i32) -> (i32, i32, i32, i32) {
    %c0_i32 = arith.constant 0 : i32
    %c0_i32_0 = arith.constant 0 : i32
    %c0_i32_1 = arith.constant 0 : i32
    %c0_i32_2 = arith.constant 0 : i32
    %c0_i32_3 = arith.constant 0 : i32
    return %c0_i32, %c0_i32_0, %c0_i32_1, %c0_i32_2 : i32, i32, i32, i32
  }
  func.func @transform_1(%arg0: i32) -> (i32, i32, i32) {
    %c0_i32 = arith.constant 0 : i32
    %c0_i32_0 = arith.constant 0 : i32
    %c0_i32_1 = arith.constant 0 : i32
    %c0_i32_2 = arith.constant 0 : i32
    return %c0_i32, %c0_i32_0, %c0_i32_1 : i32, i32, i32
  }
  func.func @transform_2(%arg0: i32) -> (i32, i32, i32) {
    %c0_i32 = arith.constant 0 : i32
    %c0_i32_0 = arith.constant 0 : i32
    %c0_i32_1 = arith.constant 0 : i32
    %c0_i32_2 = arith.constant 0 : i32
    return %c0_i32, %c0_i32_0, %c0_i32_1 : i32, i32, i32
  }
  func.func @transform_3(%arg0: i32) -> (i32, i32, i32) {
    %c0_i32 = arith.constant 0 : i32
    %c0_i32_0 = arith.constant 0 : i32
    %c0_i32_1 = arith.constant 0 : i32
    %c0_i32_2 = arith.constant 0 : i32
    return %c0_i32, %c0_i32_0, %c0_i32_1 : i32, i32, i32
  }
}

</mosaic_0001>

<llo_original>
// kernel: sdp_model.1
$region0: #{sdp_model.1}
  #allocation0 [shape = 'u32[]', space=smem, size = 0x4, offset = 0x4, fixed_abs, tag = 'smem constant byte address 0x4 - core index']
  #allocation1 [shape = 'u32[144,128]{1,0:T(1,128)}', space=vmem, size = 0x12000, scoped, tag = 'internal scratch']
  %s0 = inlined_call_operand.vmem [shape: bf16[3,2,32,32], index: 0, kind: input, shape index: {}]
  %s1 = inlined_call_operand.vmem [shape: bf16[3,32,32], index: 1, kind: input, shape index: {}]
  %s2 = inlined_call_operand.vmem [shape: f32[3,32,32], index: 2, kind: input, shape index: {}]
  %s3 = inlined_call_operand.hbm [shape: f32[2,32,32], index: 3, kind: output, shape index: {}]
  %s4 = sld [smem:[#allocation0]]
  $region22: #{sdp_model.1} parent=0
    _
  %s6 = ssub.s32 1, %s4
  %s7 = scalar_select 0, %s6, %s4
  $region1: #{sdp_model.1} parent=0
    #allocation2 [shape = 'u8[32768]{0}', space=vmem, size = 0x8000, scoped, tag = 'output window, operand 0, single buffered']
    #allocation3 [shape = 's32[1]{0}', space=sflag, size = 0x4, scoped, tag = 'scoped memory for sdp_model.1']
    %8 = vsyncpa [#allocation3], 0
    // Predicated region
    $region2: #{sdp_model.1} parent=1 // pred_check
      _
    $region3: #{sdp_model.1} parent=1 // pred_check_branch
      %10 = sbr.rel (0) target = $region5
    $region4: #{sdp_model.1} parent=1 // pred_region
      _
    $region5: #{sdp_model.1} parent=1 // pred_fallthru
      _
    // Predicated region
    $region6: #{sdp_model.1} parent=1 // pred_check
      _
    $region7: #{sdp_model.1} parent=1 // pred_check_branch
      %12 = sbr.rel (0) target = $region9
    $region8: #{sdp_model.1} parent=1 // pred_region
      _
    $region9: #{sdp_model.1} parent=1 // pred_fallthru
      _
    // Predicated region
    $region10: #{sdp_model.1} parent=1 // pred_check
      _
    $region11: #{sdp_model.1} parent=1 // pred_check_branch
      %14 = sbr.rel (0) target = $region13
    $region12: #{sdp_model.1} parent=1 // pred_region
      _
    $region13: #{sdp_model.1} parent=1 // pred_fallthru
      _
    %v16 = vld [vmem:[%s1] sm:$0xf]
    %v17 = vld [vmem:[%s1 + $0x4] sm:$0xf]
    %v18 = vld [vmem:[%s1 + $0x8] sm:$0xf]
    %v19 = vld [vmem:[%s1 + $0xc] sm:$0xf]
    %s20 = scalar_lea.vmem %s1, 16
    %v21 = vld [vmem:[%s20] sm:$0xf]
    %v22 = vld [vmem:[%s20 + $0x4] sm:$0xf]
    %v23 = vld [vmem:[%s20 + $0x8] sm:$0xf]
    %v24 = vld [vmem:[%s20 + $0xc] sm:$0xf]
    %s25 = scalar_lea.vmem %s1, 32
    %v26 = vld [vmem:[%s25] sm:$0xf]
    %v27 = vld [vmem:[%s25 + $0x4] sm:$0xf]
    %v28 = vld [vmem:[%s25 + $0x8] sm:$0xf]
    %v29 = vld [vmem:[%s25 + $0xc] sm:$0xf]
    %v30 = vld [vmem:[%s2] sm:$0xff]
    %v31 = vld [vmem:[%s2 + $0x8] sm:$0xff]
    %v32 = vld [vmem:[%s2 + $0x10] sm:$0xff]
    %v33 = vld [vmem:[%s2 + $0x18] sm:$0xff]
    %s34 = scalar_lea.vmem %s2, 32
    %v35 = vld [vmem:[%s34] sm:$0xff]
    %v36 = vld [vmem:[%s34 + $0x8] sm:$0xff]
    %v37 = vld [vmem:[%s34 + $0x10] sm:$0xff]
    %v38 = vld [vmem:[%s34 + $0x18] sm:$0xff]
    %s39 = scalar_lea.vmem %s2, 64
    %v40 = vld [vmem:[%s39] sm:$0xff]
    %v41 = vld [vmem:[%s39 + $0x8] sm:$0xff]
    %v42 = vld [vmem:[%s39 + $0x10] sm:$0xff]
    %v43 = vld [vmem:[%s39 + $0x18] sm:$0xff]
    %v44 = vld [vmem:[%s0] sm:$0xf]
    %v45 = vld [vmem:[%s0 + $0x4] sm:$0xf]
    %v46 = vld [vmem:[%s0 + $0x8] sm:$0xf]
    %v47 = vld [vmem:[%s0 + $0xc] sm:$0xf]
    %s48 = scalar_lea.vmem %s0, 32
    %v49 = vld [vmem:[%s48] sm:$0xf]
    %v50 = vld [vmem:[%s48 + $0x4] sm:$0xf]
    %v51 = vld [vmem:[%s48 + $0x8] sm:$0xf]
    %v52 = vld [vmem:[%s48 + $0xc] sm:$0xf]
    %s53 = scalar_lea.vmem %s0, 64
    %v54 = vld [vmem:[%s53] sm:$0xf]
    %v55 = vld [vmem:[%s53 + $0x4] sm:$0xf]
    %v56 = vld [vmem:[%s53 + $0x8] sm:$0xf]
    %v57 = vld [vmem:[%s53 + $0xc] sm:$0xf]
    %v62 = vunpack.c.l.b16 %v16
    %v63 = vunpack.c.l.b16 %v17
    %v64 = vunpack.c.l.b16 %v18
    %v65 = vunpack.c.l.b16 %v19
    %v66 = vpack.c.b16 %v63, %v62
    %v67 = vpack.c.b16 %v65, %v64
    %v72 = vunpack.c.l.b16 %v44
    %v73 = vunpack.c.l.b16 %v45
    %v74 = vunpack.c.l.b16 %v46
    %v75 = vunpack.c.l.b16 %v47
    %v76 = vpack.c.b16 %v73, %v72
    %v77 = vpack.c.b16 %v75, %v74
    %vm78 = vcmask 261120
    %v80 = vsel %vm78, %v66, 0
    %v83 = vsel %vm78, %v67, 0
    %v86 = vsel %vm78, %v76, 0
    %v89 = vsel %vm78, %v77, 0
    %91 = vmatprep.subr.bf16.mxu0 0
    %92 = vmatpush1.bf16.xpose.msra.mxu0 %v86
    %93 = vmatprep.subr.bf16.mxu0 0
    %94 = vmatpush1.bf16.xpose.msra.mxu0 %v89
    %95 = vmatprep.subr.bf16.mxu0 0
    %96 = vmatpush1.bf16.xpose.msra.mxu0 0
    %97 = vmatprep.subr.bf16.mxu0 0
    %98 = vmatpush1.bf16.xpose.msra.mxu0 0
    %99 = vmatprep.subr.bf16.mxu0 0
    %100 = vmatpush1.bf16.xpose.msra.mxu0 0
    %101 = vmatprep.subr.bf16.mxu0 0
    %102 = vmatpush1.bf16.xpose.msra.mxu0 0
    %103 = vmatprep.subr.bf16.mxu0 0
    %104 = vmatpush1.bf16.xpose.msra.mxu0 0
    %105 = vmatprep.subr.bf16.mxu0 0
    %106 = vmatpush1.bf16.xpose.msra.mxu0 0
    %107 = vmatprep.subr.bf16.mxu0 0
    %108 = vmatpush1.bf16.xpose.msra.mxu0 0
    %109 = vmatprep.subr.bf16.mxu0 0
    %110 = vmatpush1.bf16.xpose.msra.mxu0 0
    %111 = vmatprep.subr.bf16.mxu0 0
    %112 = vmatpush1.bf16.xpose.msra.mxu0 0
    %113 = vmatprep.subr.bf16.mxu0 0
    %114 = vmatpush1.bf16.xpose.msra.mxu0 0
    %115 = vmatprep.subr.bf16.mxu0 0
    %116 = vmatpush1.bf16.xpose.msra.mxu0 0
    %117 = vmatprep.subr.bf16.mxu0 0
    %118 = vmatpush1.bf16.xpose.msra.mxu0 0
    %119 = vmatprep.subr.bf16.mxu0 0
    %120 = vmatpush1.bf16.xpose.msra.mxu0 0
    %121 = vmatprep.subr.bf16.mxu0 0
    %122 = vmatpush1.bf16.xpose.msra.mxu0 0
    %123 = vmatprep.mubr.bf16.mxu0 0
    %124 = vmatmul.mubr.bf16.gmra.mrb[0].mxu0 %v80
    %v125 = vpop.f32.mrb[0].mxu0
    %v126 = vadd.f32 %v30, %v125
    %v127 = vpop.f32.mrb[0].mxu0
    %v128 = vpop.f32.mrb[0].mxu0
    %v129 = vadd.f32 %v31, %v128
    %v130 = vpop.f32.mrb[0].mxu0
    %131 = vmatprep.mubr.bf16.mxu0 0
    %132 = vmatmul.mubr.bf16.gmra.mrb[0].mxu0 %v83
    %v133 = vpop.f32.mrb[0].mxu0
    %v134 = vadd.f32 %v32, %v133
    %v135 = vpop.f32.mrb[0].mxu0
    %v136 = vpop.f32.mrb[0].mxu0
    %v137 = vadd.f32 %v33, %v136
    %v138 = vpop.f32.mrb[0].mxu0
    %139 = vdwg.mxu0
    %v144 = vunpack.c.l.b16 %v49
    %v145 = vunpack.c.l.b16 %v50
    %v146 = vunpack.c.l.b16 %v51
    %v147 = vunpack.c.l.b16 %v52
    %v148 = vpack.c.b16 %v145, %v144
    %v149 = vpack.c.b16 %v147, %v146
    %v154 = vunpack.c.l.b16 %v21
    %v155 = vunpack.c.l.b16 %v22
    %v156 = vunpack.c.l.b16 %v23
    %v157 = vunpack.c.l.b16 %v24
    %v158 = vpack.c.b16 %v155, %v154
    %v159 = vpack.c.b16 %v157, %v156
    %v161 = vsel %vm78, %v148, 0
    %v164 = vsel %vm78, %v149, 0
    %v167 = vsel %vm78, %v158, 0
    %v170 = vsel %vm78, %v159, 0
    %172 = vmatprep.subr.bf16.mxu0 0
    %173 = vmatpush1.bf16.xpose.msra.mxu0 %v167
    %174 = vmatprep.subr.bf16.mxu0 0
    %175 = vmatpush1.bf16.xpose.msra.mxu0 %v170
    %176 = vmatprep.subr.bf16.mxu0 0
    %177 = vmatpush1.bf16.xpose.msra.mxu0 0
    %178 = vmatprep.subr.bf16.mxu0 0
    %179 = vmatpush1.bf16.xpose.msra.mxu0 0
    %180 = vmatprep.subr.bf16.mxu0 0
    %181 = vmatpush1.bf16.xpose.msra.mxu0 0
    %182 = vmatprep.subr.bf16.mxu0 0
    %183 = vmatpush1.bf16.xpose.msra.mxu0 0
    %184 = vmatprep.subr.bf16.mxu0 0
    %185 = vmatpush1.bf16.xpose.msra.mxu0 0
    %186 = vmatprep.subr.bf16.mxu0 0
    %187 = vmatpush1.bf16.xpose.msra.mxu0 0
    %188 = vmatprep.subr.bf16.mxu0 0
    %189 = vmatpush1.bf16.xpose.msra.mxu0 0
    %190 = vmatprep.subr.bf16.mxu0 0
    %191 = vmatpush1.bf16.xpose.msra.mxu0 0
    %192 = vmatprep.subr.bf16.mxu0 0
    %193 = vmatpush1.bf16.xpose.msra.mxu0 0
    %194 = vmatprep.subr.bf16.mxu0 0
    %195 = vmatpush1.bf16.xpose.msra.mxu0 0
    %196 = vmatprep.subr.bf16.mxu0 0
    %197 = vmatpush1.bf16.xpose.msra.mxu0 0
    %198 = vmatprep.subr.bf16.mxu0 0
    %199 = vmatpush1.bf16.xpose.msra.mxu0 0
    %200 = vmatprep.subr.bf16.mxu0 0
    %201 = vmatpush1.bf16.xpose.msra.mxu0 0
    %202 = vmatprep.subr.bf16.mxu0 0
    %203 = vmatpush1.bf16.xpose.msra.mxu0 0
    %204 = vmatprep.mubr.bf16.mxu0 0
    %205 = vmatmul.mubr.bf16.gmra.mrb[0].mxu0 %v161
    %v206 = vpop.f32.mrb[0].mxu0
    %v207 = vadd.f32 %v35, %v206
    %v208 = vpop.f32.mrb[0].mxu0
    %v209 = vpop.f32.mrb[0].mxu0
    %v210 = vadd.f32 %v36, %v209
    %v211 = vpop.f32.mrb[0].mxu0
    %212 = vmatprep.mubr.bf16.mxu0 0
    %213 = vmatmul.mubr.bf16.gmra.mrb[0].mxu0 %v164
    %v214 = vpop.f32.mrb[0].mxu0
    %v215 = vadd.f32 %v37, %v214
    %v216 = vpop.f32.mrb[0].mxu0
    %v217 = vpop.f32.mrb[0].mxu0
    %v218 = vadd.f32 %v38, %v217
    %v219 = vpop.f32.mrb[0].mxu0
    %220 = vdwg.mxu0
    %v225 = vunpack.c.l.b16 %v26
    %v226 = vunpack.c.l.b16 %v27
    %v227 = vunpack.c.l.b16 %v28
    %v228 = vunpack.c.l.b16 %v29
    %v229 = vpack.c.b16 %v226, %v225
    %v230 = vpack.c.b16 %v228, %v227
    %v235 = vunpack.c.l.b16 %v54
    %v236 = vunpack.c.l.b16 %v55
    %v237 = vunpack.c.l.b16 %v56
    %v238 = vunpack.c.l.b16 %v57
    %v239 = vpack.c.b16 %v236, %v235
    %v240 = vpack.c.b16 %v238, %v237
    %v242 = vsel %vm78, %v229, 0
    %v245 = vsel %vm78, %v230, 0
    %v248 = vsel %vm78, %v239, 0
    %v251 = vsel %vm78, %v240, 0
    %253 = vmatprep.subr.bf16.mxu0 0
    %254 = vmatpush1.bf16.xpose.msra.mxu0 %v248
    %255 = vmatprep.subr.bf16.mxu0 0
    %256 = vmatpush1.bf16.xpose.msra.mxu0 %v251
    %257 = vmatprep.subr.bf16.mxu0 0
    %258 = vmatpush1.bf16.xpose.msra.mxu0 0
    %259 = vmatprep.subr.bf16.mxu0 0
    %260 = vmatpush1.bf16.xpose.msra.mxu0 0
    %261 = vmatprep.subr.bf16.mxu0 0
    %262 = vmatpush1.bf16.xpose.msra.mxu0 0
    %263 = vmatprep.subr.bf16.mxu0 0
    %264 = vmatpush1.bf16.xpose.msra.mxu0 0
    %265 = vmatprep.subr.bf16.mxu0 0
    %266 = vmatpush1.bf16.xpose.msra.mxu0 0
    %267 = vmatprep.subr.bf16.mxu0 0
    %268 = vmatpush1.bf16.xpose.msra.mxu0 0
    %269 = vmatprep.subr.bf16.mxu0 0
    %270 = vmatpush1.bf16.xpose.msra.mxu0 0
    %271 = vmatprep.subr.bf16.mxu0 0
    %272 = vmatpush1.bf16.xpose.msra.mxu0 0
    %273 = vmatprep.subr.bf16.mxu0 0
    %274 = vmatpush1.bf16.xpose.msra.mxu0 0
    %275 = vmatprep.subr.bf16.mxu0 0
    %276 = vmatpush1.bf16.xpose.msra.mxu0 0
    %277 = vmatprep.subr.bf16.mxu0 0
    %278 = vmatpush1.bf16.xpose.msra.mxu0 0
    %279 = vmatprep.subr.bf16.mxu0 0
    %280 = vmatpush1.bf16.xpose.msra.mxu0 0
    %281 = vmatprep.subr.bf16.mxu0 0
    %282 = vmatpush1.bf16.xpose.msra.mxu0 0
    %283 = vmatprep.subr.bf16.mxu0 0
    %284 = vmatpush1.bf16.xpose.msra.mxu0 0
    %285 = vmatprep.mubr.bf16.mxu0 0
    %286 = vmatmul.mubr.bf16.gmra.mrb[0].mxu0 %v242
    %v287 = vpop.f32.mrb[0].mxu0
    %v288 = vadd.f32 %v40, %v287
    %v289 = vpop.f32.mrb[0].mxu0
    %v290 = vpop.f32.mrb[0].mxu0
    %v291 = vadd.f32 %v41, %v290
    %v292 = vpop.f32.mrb[0].mxu0
    %293 = vmatprep.mubr.bf16.mxu0 0
    %294 = vmatmul.mubr.bf16.gmra.mrb[0].mxu0 %v245
    %v295 = vpop.f32.mrb[0].mxu0
    %v296 = vadd.f32 %v42, %v295
    %v297 = vpop.f32.mrb[0].mxu0
    %v298 = vpop.f32.mrb[0].mxu0
    %v299 = vadd.f32 %v43, %v298
    %v300 = vpop.f32.mrb[0].mxu0
    %301 = vdwg.mxu0
    %v302 = vpack.c.bf16 %v129, %v126
    %v303 = vpack.c.bf16 %v137, %v134
    %v304 = vpack.c.bf16 %v210, %v207
    %v305 = vpack.c.bf16 %v218, %v215
    %v307 = vsel %vm78, %v302, 0
    %v310 = vsel %vm78, %v303, 0
    %v313 = vsel %vm78, %v304, 0
    %v316 = vsel %vm78, %v305, 0
    %318 = vmatprep.subr.bf16.mxu0 0
    %319 = vmatpush1.bf16.xpose.msra.mxu0 %v313
    %320 = vmatprep.subr.bf16.mxu0 0
    %321 = vmatpush1.bf16.xpose.msra.mxu0 %v316
    %322 = vmatprep.subr.bf16.mxu0 0
    %323 = vmatpush1.bf16.xpose.msra.mxu0 0
    %324 = vmatprep.subr.bf16.mxu0 0
    %325 = vmatpush1.bf16.xpose.msra.mxu0 0
    %326 = vmatprep.subr.bf16.mxu0 0
    %327 = vmatpush1.bf16.xpose.msra.mxu0 0
    %328 = vmatprep.subr.bf16.mxu0 0
    %329 = vmatpush1.bf16.xpose.msra.mxu0 0
    %330 = vmatprep.subr.bf16.mxu0 0
    %331 = vmatpush1.bf16.xpose.msra.mxu0 0
    %332 = vmatprep.subr.bf16.mxu0 0
    %333 = vmatpush1.bf16.xpose.msra.mxu0 0
    %334 = vmatprep.subr.bf16.mxu0 0
    %335 = vmatpush1.bf16.xpose.msra.mxu0 0
    %336 = vmatprep.subr.bf16.mxu0 0
    %337 = vmatpush1.bf16.xpose.msra.mxu0 0
    %338 = vmatprep.subr.bf16.mxu0 0
    %339 = vmatpush1.bf16.xpose.msra.mxu0 0
    %340 = vmatprep.subr.bf16.mxu0 0
    %341 = vmatpush1.bf16.xpose.msra.mxu0 0
    %342 = vmatprep.subr.bf16.mxu0 0
    %343 = vmatpush1.bf16.xpose.msra.mxu0 0
    %344 = vmatprep.subr.bf16.mxu0 0
    %345 = vmatpush1.bf16.xpose.msra.mxu0 0
    %346 = vmatprep.subr.bf16.mxu0 0
    %347 = vmatpush1.bf16.xpose.msra.mxu0 0
    %348 = vmatprep.subr.bf16.mxu0 0
    %349 = vmatpush1.bf16.xpose.msra.mxu0 0
    %350 = vmatprep.mubr.bf16.mxu0 0
    %351 = vmatmul.mubr.bf16.gmra.mrb[0].mxu0 %v307
    %v352 = vpop.f32.mrb[0].mxu0
    %v353 = vadd.f32 0.0, %v352
    %v354 = vpop.f32.mrb[0].mxu0
    %v355 = vpop.f32.mrb[0].mxu0
    %v356 = vadd.f32 0.0, %v355
    %v357 = vpop.f32.mrb[0].mxu0
    %358 = vmatprep.mubr.bf16.mxu0 0
    %359 = vmatmul.mubr.bf16.gmra.mrb[0].mxu0 %v310
    %v360 = vpop.f32.mrb[0].mxu0
    %v361 = vadd.f32 0.0, %v360
    %v362 = vpop.f32.mrb[0].mxu0
    %v363 = vpop.f32.mrb[0].mxu0
    %v364 = vadd.f32 0.0, %v363
    %v365 = vpop.f32.mrb[0].mxu0
    %366 = vdwg.mxu0
    %v367 = vsel %vm78, %v353, -inf
    %368 = vmax.xlane.f32.xlu0 %v367
    %v369 = vpop.xlane.xlu0 %368
    %v370 = vsel %vm78, %v356, -inf
    %371 = vmax.xlane.f32.xlu0 %v370
    %v372 = vpop.xlane.xlu0 %371
    %v373 = vsel %vm78, %v361, -inf
    %374 = vmax.xlane.f32.xlu0 %v373
    %v375 = vpop.xlane.xlu0 %374
    %v376 = vsel %vm78, %v364, -inf
    %377 = vmax.xlane.f32.xlu0 %v376
    %v378 = vpop.xlane.xlu0 %377
    %v379 = vsub.f32 %v353, %v369
    %v380 = vsub.f32 %v356, %v372
    %v381 = vsub.f32 %v361, %v375
    %v382 = vsub.f32 %v364, %v378
    %v383 = vmul.f32 %v379, 1.442695
    %v384 = vpow.pop %v383
    %v385 = vmul.f32 %v380, 1.442695
    %v386 = vpow.pop %v385
    %v387 = vmul.f32 %v381, 1.442695
    %v388 = vpow.pop %v387
    %v389 = vmul.f32 %v382, 1.442695
    %v390 = vpow.pop %v389
    %v391 = vsel %vm78, %v384, 0.0
    %392 = vadd.xlane.f32.xlu0 %v391
    %v393 = vpop.xlane.xlu0 %392
    %v394 = vsel %vm78, %v386, 0.0
    %395 = vadd.xlane.f32.xlu0 %v394
    %v396 = vpop.xlane.xlu0 %395
    %v397 = vsel %vm78, %v388, 0.0
    %398 = vadd.xlane.f32.xlu0 %v397
    %v399 = vpop.xlane.xlu0 %398
    %v400 = vsel %vm78, %v390, 0.0
    %401 = vadd.xlane.f32.xlu0 %v400
    %v402 = vpop.xlane.xlu0 %401
    %v403 = vrcp.pop %v393
    %v404 = vrcp.pop %v396
    %v405 = vrcp.pop %v399
    %v406 = vrcp.pop %v402
    %v407 = vmul.f32 %v384, %v403
    %v408 = vmul.f32 %v386, %v404
    %v409 = vmul.f32 %v388, %v405
    %v410 = vmul.f32 %v390, %v406
    %v411 = vpack.c.bf16 %v291, %v288
    %v412 = vpack.c.bf16 %v299, %v296
    %v413 = vpack.c.bf16 %v408, %v407
    %v414 = vpack.c.bf16 %v410, %v409
    %v416 = vsel %vm78, %v411, 0
    %v419 = vsel %vm78, %v412, 0
    %v422 = vsel %vm78, %v413, 0
    %v425 = vsel %vm78, %v414, 0
    %427 = vmatprep.subr.bf16.mxu0 0
    %428 = vmatpush1.bf16.xpose.msra.mxu0 %v422
    %429 = vmatprep.subr.bf16.mxu0 0
    %430 = vmatpush1.bf16.xpose.msra.mxu0 %v425
    %431 = vmatprep.subr.bf16.mxu0 0
    %432 = vmatpush1.bf16.xpose.msra.mxu0 0
    %433 = vmatprep.subr.bf16.mxu0 0
    %434 = vmatpush1.bf16.xpose.msra.mxu0 0
    %435 = vmatprep.subr.bf16.mxu0 0
    %436 = vmatpush1.bf16.xpose.msra.mxu0 0
    %437 = vmatprep.subr.bf16.mxu0 0
    %438 = vmatpush1.bf16.xpose.msra.mxu0 0
    %439 = vmatprep.subr.bf16.mxu0 0
    %440 = vmatpush1.bf16.xpose.msra.mxu0 0
    %441 = vmatprep.subr.bf16.mxu0 0
    %442 = vmatpush1.bf16.xpose.msra.mxu0 0
    %443 = vmatprep.subr.bf16.mxu0 0
    %444 = vmatpush1.bf16.xpose.msra.mxu0 0
    %445 = vmatprep.subr.bf16.mxu0 0
    %446 = vmatpush1.bf16.xpose.msra.mxu0 0
    %447 = vmatprep.subr.bf16.mxu0 0
    %448 = vmatpush1.bf16.xpose.msra.mxu0 0
    %449 = vmatprep.subr.bf16.mxu0 0
    %450 = vmatpush1.bf16.xpose.msra.mxu0 0
    %451 = vmatprep.subr.bf16.mxu0 0
    %452 = vmatpush1.bf16.xpose.msra.mxu0 0
    %453 = vmatprep.subr.bf16.mxu0 0
    %454 = vmatpush1.bf16.xpose.msra.mxu0 0
    %455 = vmatprep.subr.bf16.mxu0 0
    %456 = vmatpush1.bf16.xpose.msra.mxu0 0
    %457 = vmatprep.subr.bf16.mxu0 0
    %458 = vmatpush1.bf16.xpose.msra.mxu0 0
    %459 = vmatprep.mubr.bf16.mxu0 0
    %460 = vmatmul.mubr.bf16.gmra.mrb[0].mxu0 %v416
    %v461 = vpop.f32.mrb[0].mxu0
    %v462 = vadd.f32 0.0, %v461
    %v463 = vpop.f32.mrb[0].mxu0
    %v464 = vpop.f32.mrb[0].mxu0
    %v465 = vadd.f32 0.0, %v464
    %v466 = vpop.f32.mrb[0].mxu0
    %467 = vmatprep.mubr.bf16.mxu0 0
    %468 = vmatmul.mubr.bf16.gmra.mrb[0].mxu0 %v419
    %v469 = vpop.f32.mrb[0].mxu0
    %v470 = vadd.f32 0.0, %v469
    %v471 = vpop.f32.mrb[0].mxu0
    %v472 = vpop.f32.mrb[0].mxu0
    %v473 = vadd.f32 0.0, %v472
    %v474 = vpop.f32.mrb[0].mxu0
    %475 = vdwg.mxu0
    %476 = vst.msk [vmem:[#allocation2] sm:$0xff] %vm78, %v462
    %477 = vst.msk [vmem:[#allocation2 + $0x8] sm:$0xff] %vm78, %v465
    %478 = vst.msk [vmem:[#allocation2 + $0x10] sm:$0xff] %vm78, %v470
    %479 = vst.msk [vmem:[#allocation2 + $0x18] sm:$0xff] %vm78, %v473
    %s480 = scalar_lea.vmem %s0, 16
    %v481 = vld [vmem:[%s480] sm:$0xf]
    %v482 = vld [vmem:[%s480 + $0x4] sm:$0xf]
    %v483 = vld [vmem:[%s480 + $0x8] sm:$0xf]
    %v484 = vld [vmem:[%s480 + $0xc] sm:$0xf]
    %s485 = scalar_lea.vmem %s0, 48
    %v486 = vld [vmem:[%s485] sm:$0xf]
    %v487 = vld [vmem:[%s485 + $0x4] sm:$0xf]
    %v488 = vld [vmem:[%s485 + $0x8] sm:$0xf]
    %v489 = vld [vmem:[%s485 + $0xc] sm:$0xf]
    %s490 = scalar_lea.vmem %s0, 80
    %v491 = vld [vmem:[%s490] sm:$0xf]
    %v492 = vld [vmem:[%s490 + $0x4] sm:$0xf]
    %v493 = vld [vmem:[%s490 + $0x8] sm:$0xf]
    %v494 = vld [vmem:[%s490 + $0xc] sm:$0xf]
    %v499 = vunpack.c.l.b16 %v481
    %v500 = vunpack.c.l.b16 %v482
    %v501 = vunpack.c.l.b16 %v483
    %v502 = vunpack.c.l.b16 %v484
    %v503 = vpack.c.b16 %v500, %v499
    %v504 = vpack.c.b16 %v502, %v501
    %v506 = vsel %vm78, %v503, 0
    %v509 = vsel %vm78, %v504, 0
    %511 = vmatprep.subr.bf16.mxu0 0
    %512 = vmatpush1.bf16.xpose.msra.mxu0 %v506
    %513 = vmatprep.subr.bf16.mxu0 0
    %514 = vmatpush1.bf16.xpose.msra.mxu0 %v509
    %515 = vmatprep.subr.bf16.mxu0 0
    %516 = vmatpush1.bf16.xpose.msra.mxu0 0
    %517 = vmatprep.subr.bf16.mxu0 0
    %518 = vmatpush1.bf16.xpose.msra.mxu0 0
    %519 = vmatprep.subr.bf16.mxu0 0
    %520 = vmatpush1.bf16.xpose.msra.mxu0 0
    %521 = vmatprep.subr.bf16.mxu0 0
    %522 = vmatpush1.bf16.xpose.msra.mxu0 0
    %523 = vmatprep.subr.bf16.mxu0 0
    %524 = vmatpush1.bf16.xpose.msra.mxu0 0
    %525 = vmatprep.subr.bf16.mxu0 0
    %526 = vmatpush1.bf16.xpose.msra.mxu0 0
    %527 = vmatprep.subr.bf16.mxu0 0
    %528 = vmatpush1.bf16.xpose.msra.mxu0 0
    %529 = vmatprep.subr.bf16.mxu0 0
    %530 = vmatpush1.bf16.xpose.msra.mxu0 0
    %531 = vmatprep.subr.bf16.mxu0 0
    %532 = vmatpush1.bf16.xpose.msra.mxu0 0
    %533 = vmatprep.subr.bf16.mxu0 0
    %534 = vmatpush1.bf16.xpose.msra.mxu0 0
    %535 = vmatprep.subr.bf16.mxu0 0
    %536 = vmatpush1.bf16.xpose.msra.mxu0 0
    %537 = vmatprep.subr.bf16.mxu0 0
    %538 = vmatpush1.bf16.xpose.msra.mxu0 0
    %539 = vmatprep.subr.bf16.mxu0 0
    %540 = vmatpush1.bf16.xpose.msra.mxu0 0
    %541 = vmatprep.subr.bf16.mxu0 0
    %542 = vmatpush1.bf16.xpose.msra.mxu0 0
    %543 = vmatprep.mubr.bf16.mxu0 0
    %544 = vmatmul.mubr.bf16.gmra.mrb[0].mxu0 %v80
    %v545 = vpop.f32.mrb[0].mxu0
    %v546 = vadd.f32 %v30, %v545
    %v547 = vpop.f32.mrb[0].mxu0
    %v548 = vpop.f32.mrb[0].mxu0
    %v549 = vadd.f32 %v31, %v548
    %v550 = vpop.f32.mrb[0].mxu0
    %551 = vmatprep.mubr.bf16.mxu0 0
    %552 = vmatmul.mubr.bf16.gmra.mrb[0].mxu0 %v83
    %v553 = vpop.f32.mrb[0].mxu0
    %v554 = vadd.f32 %v32, %v553
    %v555 = vpop.f32.mrb[0].mxu0
    %v556 = vpop.f32.mrb[0].mxu0
    %v557 = vadd.f32 %v33, %v556
    %v558 = vpop.f32.mrb[0].mxu0
    %559 = vdwg.mxu0
    %v564 = vunpack.c.l.b16 %v486
    %v565 = vunpack.c.l.b16 %v487
    %v566 = vunpack.c.l.b16 %v488
    %v567 = vunpack.c.l.b16 %v489
    %v568 = vpack.c.b16 %v565, %v564
    %v569 = vpack.c.b16 %v567, %v566
    %v571 = vsel %vm78, %v568, 0
    %v574 = vsel %vm78, %v569, 0
    %576 = vmatprep.subr.bf16.mxu0 0
    %577 = vmatpush1.bf16.xpose.msra.mxu0 %v167
    %578 = vmatprep.subr.bf16.mxu0 0
    %579 = vmatpush1.bf16.xpose.msra.mxu0 %v170
    %580 = vmatprep.subr.bf16.mxu0 0
    %581 = vmatpush1.bf16.xpose.msra.mxu0 0
    %582 = vmatprep.subr.bf16.mxu0 0
    %583 = vmatpush1.bf16.xpose.msra.mxu0 0
    %584 = vmatprep.subr.bf16.mxu0 0
    %585 = vmatpush1.bf16.xpose.msra.mxu0 0
    %586 = vmatprep.subr.bf16.mxu0 0
    %587 = vmatpush1.bf16.xpose.msra.mxu0 0
    %588 = vmatprep.subr.bf16.mxu0 0
    %589 = vmatpush1.bf16.xpose.msra.mxu0 0
    %590 = vmatprep.subr.bf16.mxu0 0
    %591 = vmatpush1.bf16.xpose.msra.mxu0 0
    %592 = vmatprep.subr.bf16.mxu0 0
    %593 = vmatpush1.bf16.xpose.msra.mxu0 0
    %594 = vmatprep.subr.bf16.mxu0 0
    %595 = vmatpush1.bf16.xpose.msra.mxu0 0
    %596 = vmatprep.subr.bf16.mxu0 0
    %597 = vmatpush1.bf16.xpose.msra.mxu0 0
    %598 = vmatprep.subr.bf16.mxu0 0
    %599 = vmatpush1.bf16.xpose.msra.mxu0 0
    %600 = vmatprep.subr.bf16.mxu0 0
    %601 = vmatpush1.bf16.xpose.msra.mxu0 0
    %602 = vmatprep.subr.bf16.mxu0 0
    %603 = vmatpush1.bf16.xpose.msra.mxu0 0
    %604 = vmatprep.subr.bf16.mxu0 0
    %605 = vmatpush1.bf16.xpose.msra.mxu0 0
    %606 = vmatprep.subr.bf16.mxu0 0
    %607 = vmatpush1.bf16.xpose.msra.mxu0 0
    %608 = vmatprep.mubr.bf16.mxu0 0
    %609 = vmatmul.mubr.bf16.gmra.mrb[0].mxu0 %v571
    %v610 = vpop.f32.mrb[0].mxu0
    %v611 = vadd.f32 %v35, %v610
    %v612 = vpop.f32.mrb[0].mxu0
    %v613 = vpop.f32.mrb[0].mxu0
    %v614 = vadd.f32 %v36, %v613
    %v615 = vpop.f32.mrb[0].mxu0
    %616 = vmatprep.mubr.bf16.mxu0 0
    %617 = vmatmul.mubr.bf16.gmra.mrb[0].mxu0 %v574
    %v618 = vpop.f32.mrb[0].mxu0
    %v619 = vadd.f32 %v37, %v618
    %v620 = vpop.f32.mrb[0].mxu0
    %v621 = vpop.f32.mrb[0].mxu0
    %v622 = vadd.f32 %v38, %v621
    %v623 = vpop.f32.mrb[0].mxu0
    %624 = vdwg.mxu0
    %v629 = vunpack.c.l.b16 %v491
    %v630 = vunpack.c.l.b16 %v492
    %v631 = vunpack.c.l.b16 %v493
    %v632 = vunpack.c.l.b16 %v494
    %v633 = vpack.c.b16 %v630, %v629
    %v634 = vpack.c.b16 %v632, %v631
    %v636 = vsel %vm78, %v633, 0
    %v639 = vsel %vm78, %v634, 0
    %641 = vmatprep.subr.bf16.mxu0 0
    %642 = vmatpush1.bf16.xpose.msra.mxu0 %v636
    %643 = vmatprep.subr.bf16.mxu0 0
    %644 = vmatpush1.bf16.xpose.msra.mxu0 %v639
    %645 = vmatprep.subr.bf16.mxu0 0
    %646 = vmatpush1.bf16.xpose.msra.mxu0 0
    %647 = vmatprep.subr.bf16.mxu0 0
    %648 = vmatpush1.bf16.xpose.msra.mxu0 0
    %649 = vmatprep.subr.bf16.mxu0 0
    %650 = vmatpush1.bf16.xpose.msra.mxu0 0
    %651 = vmatprep.subr.bf16.mxu0 0
    %652 = vmatpush1.bf16.xpose.msra.mxu0 0
    %653 = vmatprep.subr.bf16.mxu0 0
    %654 = vmatpush1.bf16.xpose.msra.mxu0 0
    %655 = vmatprep.subr.bf16.mxu0 0
    %656 = vmatpush1.bf16.xpose.msra.mxu0 0
    %657 = vmatprep.subr.bf16.mxu0 0
    %658 = vmatpush1.bf16.xpose.msra.mxu0 0
    %659 = vmatprep.subr.bf16.mxu0 0
    %660 = vmatpush1.bf16.xpose.msra.mxu0 0
    %661 = vmatprep.subr.bf16.mxu0 0
    %662 = vmatpush1.bf16.xpose.msra.mxu0 0
    %663 = vmatprep.subr.bf16.mxu0 0
    %664 = vmatpush1.bf16.xpose.msra.mxu0 0
    %665 = vmatprep.subr.bf16.mxu0 0
    %666 = vmatpush1.bf16.xpose.msra.mxu0 0
    %667 = vmatprep.subr.bf16.mxu0 0
    %668 = vmatpush1.bf16.xpose.msra.mxu0 0
    %669 = vmatprep.subr.bf16.mxu0 0
    %670 = vmatpush1.bf16.xpose.msra.mxu0 0
    %671 = vmatprep.subr.bf16.mxu0 0
    %672 = vmatpush1.bf16.xpose.msra.mxu0 0
    %673 = vmatprep.mubr.bf16.mxu0 0
    %674 = vmatmul.mubr.bf16.gmra.mrb[0].mxu0 %v242
    %v675 = vpop.f32.mrb[0].mxu0
    %v676 = vadd.f32 %v40, %v675
    %v677 = vpop.f32.mrb[0].mxu0
    %v678 = vpop.f32.mrb[0].mxu0
    %v679 = vadd.f32 %v41, %v678
    %v680 = vpop.f32.mrb[0].mxu0
    %681 = vmatprep.mubr.bf16.mxu0 0
    %682 = vmatmul.mubr.bf16.gmra.mrb[0].mxu0 %v245
    %v683 = vpop.f32.mrb[0].mxu0
    %v684 = vadd.f32 %v42, %v683
    %v685 = vpop.f32.mrb[0].mxu0
    %v686 = vpop.f32.mrb[0].mxu0
    %v687 = vadd.f32 %v43, %v686
    %v688 = vpop.f32.mrb[0].mxu0
    %689 = vdwg.mxu0
    %v690 = vpack.c.bf16 %v549, %v546
    %v691 = vpack.c.bf16 %v557, %v554
    %v692 = vpack.c.bf16 %v614, %v611
    %v693 = vpack.c.bf16 %v622, %v619
    %v695 = vsel %vm78, %v690, 0
    %v698 = vsel %vm78, %v691, 0
    %v701 = vsel %vm78, %v692, 0
    %v704 = vsel %vm78, %v693, 0
    %706 = vmatprep.subr.bf16.mxu0 0
    %707 = vmatpush1.bf16.xpose.msra.mxu0 %v701
    %708 = vmatprep.subr.bf16.mxu0 0
    %709 = vmatpush1.bf16.xpose.msra.mxu0 %v704
    %710 = vmatprep.subr.bf16.mxu0 0
    %711 = vmatpush1.bf16.xpose.msra.mxu0 0
    %712 = vmatprep.subr.bf16.mxu0 0
    %713 = vmatpush1.bf16.xpose.msra.mxu0 0
    %714 = vmatprep.subr.bf16.mxu0 0
    %715 = vmatpush1.bf16.xpose.msra.mxu0 0
    %716 = vmatprep.subr.bf16.mxu0 0
    %717 = vmatpush1.bf16.xpose.msra.mxu0 0
    %718 = vmatprep.subr.bf16.mxu0 0
    %719 = vmatpush1.bf16.xpose.msra.mxu0 0
    %720 = vmatprep.subr.bf16.mxu0 0
    %721 = vmatpush1.bf16.xpose.msra.mxu0 0
    %722 = vmatprep.subr.bf16.mxu0 0
    %723 = vmatpush1.bf16.xpose.msra.mxu0 0
    %724 = vmatprep.subr.bf16.mxu0 0
    %725 = vmatpush1.bf16.xpose.msra.mxu0 0
    %726 = vmatprep.subr.bf16.mxu0 0
    %727 = vmatpush1.bf16.xpose.msra.mxu0 0
    %728 = vmatprep.subr.bf16.mxu0 0
    %729 = vmatpush1.bf16.xpose.msra.mxu0 0
    %730 = vmatprep.subr.bf16.mxu0 0
    %731 = vmatpush1.bf16.xpose.msra.mxu0 0
    %732 = vmatprep.subr.bf16.mxu0 0
    %733 = vmatpush1.bf16.xpose.msra.mxu0 0
    %734 = vmatprep.subr.bf16.mxu0 0
    %735 = vmatpush1.bf16.xpose.msra.mxu0 0
    %736 = vmatprep.subr.bf16.mxu0 0
    %737 = vmatpush1.bf16.xpose.msra.mxu0 0
    %738 = vmatprep.mubr.bf16.mxu0 0
    %739 = vmatmul.mubr.bf16.gmra.mrb[0].mxu0 %v695
    %v740 = vpop.f32.mrb[0].mxu0
    %v741 = vadd.f32 0.0, %v740
    %v742 = vpop.f32.mrb[0].mxu0
    %v743 = vpop.f32.mrb[0].mxu0
    %v744 = vadd.f32 0.0, %v743
    %v745 = vpop.f32.mrb[0].mxu0
    %746 = vmatprep.mubr.bf16.mxu0 0
    %747 = vmatmul.mubr.bf16.gmra.mrb[0].mxu0 %v698
    %v748 = vpop.f32.mrb[0].mxu0
    %v749 = vadd.f32 0.0, %v748
    %v750 = vpop.f32.mrb[0].mxu0
    %v751 = vpop.f32.mrb[0].mxu0
    %v752 = vadd.f32 0.0, %v751
    %v753 = vpop.f32.mrb[0].mxu0
    %754 = vdwg.mxu0
    %v755 = vsel %vm78, %v741, -inf
    %756 = vmax.xlane.f32.xlu0 %v755
    %v757 = vpop.xlane.xlu0 %756
    %v758 = vsel %vm78, %v744, -inf
    %759 = vmax.xlane.f32.xlu0 %v758
    %v760 = vpop.xlane.xlu0 %759
    %v761 = vsel %vm78, %v749, -inf
    %762 = vmax.xlane.f32.xlu0 %v761
    %v763 = vpop.xlane.xlu0 %762
    %v764 = vsel %vm78, %v752, -inf
    %765 = vmax.xlane.f32.xlu0 %v764
    %v766 = vpop.xlane.xlu0 %765
    %v767 = vsub.f32 %v741, %v757
    %v768 = vsub.f32 %v744, %v760
    %v769 = vsub.f32 %v749, %v763
    %v770 = vsub.f32 %v752, %v766
    %v771 = vmul.f32 %v767, 1.442695
    %v772 = vpow.pop %v771
    %v773 = vmul.f32 %v768, 1.442695
    %v774 = vpow.pop %v773
    %v775 = vmul.f32 %v769, 1.442695
    %v776 = vpow.pop %v775
    %v777 = vmul.f32 %v770, 1.442695
    %v778 = vpow.pop %v777
    %v779 = vsel %vm78, %v772, 0.0
    %780 = vadd.xlane.f32.xlu0 %v779
    %v781 = vpop.xlane.xlu0 %780
    %v782 = vsel %vm78, %v774, 0.0
    %783 = vadd.xlane.f32.xlu0 %v782
    %v784 = vpop.xlane.xlu0 %783
    %v785 = vsel %vm78, %v776, 0.0
    %786 = vadd.xlane.f32.xlu0 %v785
    %v787 = vpop.xlane.xlu0 %786
    %v788 = vsel %vm78, %v778, 0.0
    %789 = vadd.xlane.f32.xlu0 %v788
    %v790 = vpop.xlane.xlu0 %789
    %v791 = vrcp.pop %v781
    %v792 = vrcp.pop %v784
    %v793 = vrcp.pop %v787
    %v794 = vrcp.pop %v790
    %v795 = vmul.f32 %v772, %v791
    %v796 = vmul.f32 %v774, %v792
    %v797 = vmul.f32 %v776, %v793
    %v798 = vmul.f32 %v778, %v794
    %v799 = vpack.c.bf16 %v679, %v676
    %v800 = vpack.c.bf16 %v687, %v684
    %v801 = vpack.c.bf16 %v796, %v795
    %v802 = vpack.c.bf16 %v798, %v797
    %v804 = vsel %vm78, %v799, 0
    %v807 = vsel %vm78, %v800, 0
    %v810 = vsel %vm78, %v801, 0
    %v813 = vsel %vm78, %v802, 0
    %815 = vmatprep.subr.bf16.mxu0 0
    %816 = vmatpush1.bf16.xpose.msra.mxu0 %v810
    %817 = vmatprep.subr.bf16.mxu0 0
    %818 = vmatpush1.bf16.xpose.msra.mxu0 %v813
    %819 = vmatprep.subr.bf16.mxu0 0
    %820 = vmatpush1.bf16.xpose.msra.mxu0 0
    %821 = vmatprep.subr.bf16.mxu0 0
    %822 = vmatpush1.bf16.xpose.msra.mxu0 0
    %823 = vmatprep.subr.bf16.mxu0 0
    %824 = vmatpush1.bf16.xpose.msra.mxu0 0
    %825 = vmatprep.subr.bf16.mxu0 0
    %826 = vmatpush1.bf16.xpose.msra.mxu0 0
    %827 = vmatprep.subr.bf16.mxu0 0
    %828 = vmatpush1.bf16.xpose.msra.mxu0 0
    %829 = vmatprep.subr.bf16.mxu0 0
    %830 = vmatpush1.bf16.xpose.msra.mxu0 0
    %831 = vmatprep.subr.bf16.mxu0 0
    %832 = vmatpush1.bf16.xpose.msra.mxu0 0
    %833 = vmatprep.subr.bf16.mxu0 0
    %834 = vmatpush1.bf16.xpose.msra.mxu0 0
    %835 = vmatprep.subr.bf16.mxu0 0
    %836 = vmatpush1.bf16.xpose.msra.mxu0 0
    %837 = vmatprep.subr.bf16.mxu0 0
    %838 = vmatpush1.bf16.xpose.msra.mxu0 0
    %839 = vmatprep.subr.bf16.mxu0 0
    %840 = vmatpush1.bf16.xpose.msra.mxu0 0
    %841 = vmatprep.subr.bf16.mxu0 0
    %842 = vmatpush1.bf16.xpose.msra.mxu0 0
    %843 = vmatprep.subr.bf16.mxu0 0
    %844 = vmatpush1.bf16.xpose.msra.mxu0 0
    %845 = vmatprep.subr.bf16.mxu0 0
    %846 = vmatpush1.bf16.xpose.msra.mxu0 0
    %847 = vmatprep.mubr.bf16.mxu0 0
    %848 = vmatmul.mubr.bf16.gmra.mrb[0].mxu0 %v804
    %v849 = vpop.f32.mrb[0].mxu0
    %v850 = vadd.f32 0.0, %v849
    %v851 = vpop.f32.mrb[0].mxu0
    %v852 = vpop.f32.mrb[0].mxu0
    %v853 = vadd.f32 0.0, %v852
    %v854 = vpop.f32.mrb[0].mxu0
    %855 = vmatprep.mubr.bf16.mxu0 0
    %856 = vmatmul.mubr.bf16.gmra.mrb[0].mxu0 %v807
    %v857 = vpop.f32.mrb[0].mxu0
    %v858 = vadd.f32 0.0, %v857
    %v859 = vpop.f32.mrb[0].mxu0
    %v860 = vpop.f32.mrb[0].mxu0
    %v861 = vadd.f32 0.0, %v860
    %v862 = vpop.f32.mrb[0].mxu0
    %863 = vdwg.mxu0
    %s864 = scalar_lea.vmem [#allocation2], 32
    %865 = vst.msk [vmem:[%s864] sm:$0xff] %vm78, %v850
    %866 = vst.msk [vmem:[%s864 + $0x8] sm:$0xff] %vm78, %v853
    %867 = vst.msk [vmem:[%s864 + $0x10] sm:$0xff] %vm78, %v858
    %868 = vst.msk [vmem:[%s864 + $0x18] sm:$0xff] %vm78, %v861
    // Predicated region
    $region14: #{sdp_model.1} parent=1 // pred_check
      _
    $region15: #{sdp_model.1} parent=1 // pred_check_branch
      %870 = sbr.rel (0) target = $region17
    $region16: #{sdp_model.1} parent=1 // pred_region
      %s872 = ssub.s32 1024, 1024
      %873 = vsyncadd [#allocation3], %s872
      %s874 = sshll.u32 [#allocation2], 4
      %s875 = int_to_ptr.vmem [resolvable:$true] %s874
      %880 = dma.vmem_to_hbm [thread:$0]  %s875, 1024, %s3, [#allocation3], 128, 128, 8
    $region17: #{sdp_model.1} parent=1 // pred_fallthru
      _
    // Predicated region
    $region18: #{sdp_model.1} parent=1 // pred_check
      _
    $region19: #{sdp_model.1} parent=1 // pred_check_branch
      %882 = sbr.rel (0) target = $region21
    $region20: #{sdp_model.1} parent=1 // pred_region
      %883 = dma.done [#allocation3], 1024
    $region21: #{sdp_model.1} parent=1 // pred_fallthru
      _
    %884 = vsyncpa [#allocation3], 1

</llo_original>
